<compile_context>
chip_gen: v5e
topology: v5e:2x2
jax: 0.10.0
libtpu: 0.0.40
codegen_flags: <defaults>
</compile_context>

<pallas_src>
import functools

import jax
import jax.numpy as jnp
from jax.experimental import pallas as pl
from jax.experimental.pallas import tpu as pltpu


# ----------------------------- helpers --------------------------------------

_SIGN_OUT_SALT = 0x5D00001  # decorrelates the sign_out stream from sign_in


def _round_up(x, m):
    return (x + m - 1) // m * m


def _hash_bits(shape, base, row_stride, seed):
    """uint32 hash per element of a 2-D tile; element id = base + row*row_stride + col."""
    r = jax.lax.broadcasted_iota(jnp.int32, shape, 0)
    c = jax.lax.broadcasted_iota(jnp.int32, shape, 1)
    idx = base + r * row_stride + c
    h = idx.astype(jnp.uint32) ^ seed.astype(jnp.uint32)
    h = (h ^ (h >> 16)) * jnp.uint32(0x7FEB352D)
    h = (h ^ (h >> 15)) * jnp.uint32(0x846CA68B)
    return h ^ (h >> 16)


def _rademacher(shape, base, row_stride, seed, dtype):
    """Elementwise +-1 sign from the stateless hash (for the bf16 input-sign multiply)."""
    h = _hash_bits(shape, base, row_stride, seed)
    return jnp.where((h & jnp.uint32(0x80000000)) != 0, -1.0, 1.0).astype(dtype)


def _xor_sign_f32(x, hbits):
    """Apply a Rademacher sign to f32 data as a sign-bit XOR (no select / multiply)."""
    mask = hbits & jnp.uint32(0x80000000)
    bits = jax.lax.bitcast_convert_type(x, jnp.uint32) ^ mask
    return jax.lax.bitcast_convert_type(bits, jnp.float32)


def _pick_tm(M, tm_target=512):
    """Row tile for the 1x1 kernels: multiple of 8, divides M when possible (no padded rows
    / no post-slice) and gives >= 2 grid steps (v7x megacore).  Returns (tm, padded_M)."""
    best = None
    for t in range(8, min(tm_target, M) + 1, 8):
        if M % t == 0 and M // t >= 2:
            best = t
    if best is not None:
        return best, M
    tm = min(tm_target, max(8, _round_up((M + 1) // 2, 8)))
    return tm, _round_up(M, tm)


def _pick_th(H, W, target_rows=512):
    """Row-strip height for the 3x3 kernel: divides H, keeps the strip's matmul M (= th*W)
    modest so f32 accumulators stay VMEM/vreg friendly, output block stays 8-aligned."""
    if H * W <= target_rows:
        return H
    best = None
    for th in range(1, H):
        if H % th == 0 and th * W <= target_rows and (th * W) % 8 == 0:
            best = th
    return best if best is not None else H


# ----------------------------- 1x1 conv kernel -------------------------------

def _flipout_1x1_kernel(seed_ref, x_ref, wmu_ref, wdl_ref, b_ref, *rest):
    """Fused flipout 1x1 conv (matmul, full-K resident weights) + folded-BN bias
    + optional residual + ReLU.  Grid: (M tiles,) only."""
    if len(rest) == 2:
        r_ref, o_ref = rest
    else:
        r_ref = None
        (o_ref,) = rest

    i = pl.program_id(0)
    x = x_ref[...]                                   # (tm, K) bf16
    tm, K = x.shape
    Cop = o_ref.shape[-1]
    seed = seed_ref[0]
    row0 = i * tm

    # Flipout input sign: Rademacher from the stateless hash of the absolute element index.
    s_in = _rademacher((tm, K), row0 * K, K, seed, x.dtype)

    mu = jnp.dot(x, wmu_ref[...], preferred_element_type=jnp.float32)
    pert = jnp.dot(x * s_in, wdl_ref[...], preferred_element_type=jnp.float32)

    # Flipout output sign, applied exactly once as a sign-bit XOR on the f32 perturbation.
    h_out = _hash_bits((tm, Cop), row0 * Cop, Cop, seed ^ _SIGN_OUT_SALT)
    pert = _xor_sign_f32(pert, h_out)

    y = mu + pert + b_ref[...]                       # folded-BN bias (scale already in W)
    if r_ref is not None:
        y = y + r_ref[...].astype(jnp.float32)       # float analogue of quantized.add
    o_ref[...] = jnp.maximum(y, 0.0).astype(o_ref.dtype)


def flipout_conv1x1_bn_relu_call(seed, x2d, wmu, wdl, bias, residual2d=None,
                                 out_dtype=jnp.bfloat16, tm_target=512):
    """x2d: (M, K) bf16.  wmu/wdl: (K, Cop) bf16 (BN-scale folded, lane-dense Cop).
    bias: (1, Cop) f32.  residual2d: (M, Cop) bf16 or None.  Returns (M, Cop)."""
    M, K = x2d.shape
    Kw, Cop = wmu.shape
    assert Kw == K, (Kw, K)

    tm, Mp = _pick_tm(M, tm_target)
    if Mp != M:
        x2d = jnp.pad(x2d, ((0, Mp - M), (0, 0)))
        if residual2d is not None:
            residual2d = jnp.pad(residual2d, ((0, Mp - M), (0, 0)))

    x_spec = pl.BlockSpec((tm, K), lambda i, sref: (i, 0))
    w_spec = pl.BlockSpec((K, Cop), lambda i, sref: (0, 0))      # resident (constant index)
    b_spec = pl.BlockSpec((1, Cop), lambda i, sref: (0, 0))
    o_spec = pl.BlockSpec((tm, Cop), lambda i, sref: (i, 0))

    in_specs = [x_spec, w_spec, w_spec, b_spec]
    args = [x2d, wmu, wdl, bias]
    if residual2d is not None:
        assert residual2d.shape[1] == Cop, (residual2d.shape, Cop)
        in_specs.append(o_spec)
        args.append(residual2d)

    out = pl.pallas_call(
        _flipout_1x1_kernel,
        out_shape=jax.ShapeDtypeStruct((Mp, Cop), out_dtype),
        grid_spec=pltpu.PrefetchScalarGridSpec(
            num_scalar_prefetch=1,
            grid=(Mp // tm,),
            in_specs=in_specs,
            out_specs=o_spec,
        ),
        compiler_params=pltpu.CompilerParams(
            dimension_semantics=("parallel",),
            vmem_limit_bytes=48 * 1024 * 1024,
        ),
    )(seed, *args)
    return out if Mp == M else out[:M]


# ----------------------------- 3x3 conv kernel -------------------------------

def _flipout_3x3_kernel(seed_ref, x_ref, wmu_ref, wdl_ref, b_ref, o_ref,
                        xpad_ref, xspad_ref, *, H, W, th):
    """Fused flipout 3x3 conv (stride 1, pad 1) + folded-BN bias + ReLU.

    Grid: (image ["parallel"], row strip ["arbitrary"]).  The zero-padded activation and its
    sign-flipped copy are staged once per image into VMEM scratch (no host pad, ~1x HBM
    reads); each strip builds a (th*W, 9C) im2col slab and does one K=9C matmul pair."""
    n = pl.program_id(0)
    s = pl.program_id(1)
    C = x_ref.shape[-1]
    Cop = o_ref.shape[-1]
    seed = seed_ref[0]

    @pl.when(s == 0)
    def _():
        xpad_ref[...] = jnp.zeros_like(xpad_ref)
        xspad_ref[...] = jnp.zeros_like(xspad_ref)
        x = x_ref[0]                                               # (H, W, C) bf16
        flat = x.reshape(H * W, C)
        s_in = _rademacher((H * W, C), n * (H * W * C), C, seed, x.dtype)
        xpad_ref[1:H + 1, 1:W + 1, :] = x
        xspad_ref[1:H + 1, 1:W + 1, :] = (flat * s_in).reshape(H, W, C)

    r0 = s * th
    taps_mu, taps_pt = [], []
    for kh in range(3):                                            # unrolled im2col build
        for kw in range(3):
            taps_mu.append(
                xpad_ref[pl.ds(r0 + kh, th), kw:kw + W, :].reshape(th * W, C))
            taps_pt.append(
                xspad_ref[pl.ds(r0 + kh, th), kw:kw + W, :].reshape(th * W, C))
    a_mu = jnp.concatenate(taps_mu, axis=-1)                       # (th*W, 9C)
    a_pt = jnp.concatenate(taps_pt, axis=-1)

    mu = jnp.dot(a_mu, wmu_ref[...], preferred_element_type=jnp.float32)
    pert = jnp.dot(a_pt, wdl_ref[...], preferred_element_type=jnp.float32)

    h_out = _hash_bits((th * W, Cop), n * (H * W * Cop) + r0 * (W * Cop), Cop,
                       seed ^ _SIGN_OUT_SALT)
    pert = _xor_sign_f32(pert, h_out)

    y = mu + pert + b_ref[...]
    o_ref[0] = jnp.maximum(y, 0.0).astype(o_ref.dtype)


def flipout_conv3x3_bn_relu_call(seed, x_nhwc, wmu, wdl, bias, out_dtype=jnp.bfloat16):
    """x_nhwc: (N, H, W, C) bf16 (C already lane-dense).  wmu/wdl: (9*C, Cop) bf16.
    bias: (1, Cop) f32.  Returns (N, H*W, Cop)."""
    N, H, W, C = x_nhwc.shape
    Cop = wmu.shape[-1]
    assert wmu.shape[0] == 9 * C, (wmu.shape, C)

    th = _pick_th(H, W)
    n_strips = H // th

    kern = functools.partial(_flipout_3x3_kernel, H=H, W=W, th=th)
    return pl.pallas_call(
        kern,
        out_shape=jax.ShapeDtypeStruct((N, H * W, Cop), out_dtype),
        grid_spec=pltpu.PrefetchScalarGridSpec(
            num_scalar_prefetch=1,
            grid=(N, n_strips),
            in_specs=[
                pl.BlockSpec((1, H, W, C), lambda n, s, sref: (n, 0, 0, 0)),
                pl.BlockSpec((9 * C, Cop), lambda n, s, sref: (0, 0)),   # resident weights
                pl.BlockSpec((9 * C, Cop), lambda n, s, sref: (0, 0)),
                pl.BlockSpec((1, Cop), lambda n, s, sref: (0, 0)),
            ],
            out_specs=pl.BlockSpec((1, th * W, Cop), lambda n, s, sref: (n, s, 0)),
            scratch_shapes=[
                pltpu.VMEM((H + 2, W + 2, C), jnp.bfloat16),   # zero-padded activation
                pltpu.VMEM((H + 2, W + 2, C), jnp.bfloat16),   # sign-flipped padded copy
            ],
        ),
        compiler_params=pltpu.CompilerParams(
            dimension_semantics=("parallel", "arbitrary"),
            vmem_limit_bytes=48 * 1024 * 1024,
        ),
    )(seed, x_nhwc, wmu, wdl, bias)


# --------------------------- params: init + hoisted prep ---------------------

def init_flipout_conv(key, cin, cout, k):
    """Matches Conv2dFlipout init: mu ~ N(0, 0.1), rho ~ N(-3, 0.1); delta = softplus(rho)*eps."""
    k1, k2, k3 = jax.random.split(key, 3)
    mu = 0.1 * jax.random.normal(k1, (cout, cin, k, k), jnp.float32)
    rho = -3.0 + 0.1 * jax.random.normal(k2, (cout, cin, k, k), jnp.float32)
    sigma = jnp.log1p(jnp.exp(rho))
    eps = jax.random.normal(k3, (cout, cin, k, k), jnp.float32)
    return {"mu": mu, "delta": sigma * eps}


def init_bn(cout, eps=1e-5):
    """Fresh BatchNorm2d (eval): gamma=1, beta=0, running stats (0, 1), folded to scale/bias."""
    gamma = jnp.ones((cout,), jnp.float32)
    beta = jnp.zeros((cout,), jnp.float32)
    mean = jnp.zeros((cout,), jnp.float32)
    var = jnp.ones((cout,), jnp.float32)
    scale = gamma / jnp.sqrt(var + eps)
    return {"scale": scale, "bias": beta - mean * scale}


def _prep_1x1(conv, bn, cin_pad_to=None):
    """Hoisted weight prep: fold BN scale, transpose to (K, Cop), pad (zeros), cast bf16."""
    cout, cin = conv["mu"].shape[:2]
    cop = _round_up(cout, 128)                        # lane-dense output channels
    kp = cin if cin_pad_to is None else cin_pad_to
    wmu = (conv["mu"][:, :, 0, 0] * bn["scale"][:, None]).T       # (cin, cout)
    wdl = (conv["delta"][:, :, 0, 0] * bn["scale"][:, None]).T
    wmu = jnp.pad(wmu, ((0, kp - cin), (0, cop - cout))).astype(jnp.bfloat16)
    wdl = jnp.pad(wdl, ((0, kp - cin), (0, cop - cout))).astype(jnp.bfloat16)
    bias = jnp.pad(bn["bias"], (0, cop - cout)).reshape(1, cop).astype(jnp.float32)
    return {"wmu": wmu, "wdl": wdl, "bias": bias, "cout": cout, "cop": cop}


def _prep_3x3(conv, bn, cin_pad_to):
    """As above, laid out (9*Cin_padded, Cop) to match the in-kernel im2col column order."""
    cout, cin = conv["mu"].shape[:2]
    cop = _round_up(cout, 128)
    kp = cin_pad_to
    scale = bn["scale"][:, None, None, None]
    wmu = jnp.transpose(conv["mu"] * scale, (2, 3, 1, 0))          # (3, 3, cin, cout)
    wdl = jnp.transpose(conv["delta"] * scale, (2, 3, 1, 0))
    pad = ((0, 0), (0, 0), (0, kp - cin), (0, cop - cout))
    wmu = jnp.pad(wmu, pad).reshape(9 * kp, cop).astype(jnp.bfloat16)
    wdl = jnp.pad(wdl, pad).reshape(9 * kp, cop).astype(jnp.bfloat16)
    bias = jnp.pad(bn["bias"], (0, cop - cout)).reshape(1, cop).astype(jnp.float32)
    return {"wmu": wmu, "wdl": wdl, "bias": bias, "cout": cout, "cop": cop}


def init_bottleneck(key, inplanes, planes):
    """Init + kernel-ready prep.  Padded channel widths are chosen so conv1's padded output
    is exactly conv2's padded input, etc. (padded channels flow between layers as zeros)."""
    k1, k2, k3 = jax.random.split(key, 3)
    c1 = _round_up(planes, 128)          # conv1 padded out == conv2 padded in
    c2 = _round_up(planes, 128)          # conv2 padded out == conv3 padded in
    return {
        "conv1": _prep_1x1(init_flipout_conv(k1, inplanes, planes, 1), init_bn(planes)),
        "conv2": _prep_3x3(init_flipout_conv(k2, planes, planes, 3), init_bn(planes),
                           cin_pad_to=c1),
        "conv3": _prep_1x1(init_flipout_conv(k3, planes, planes * 4, 1),
                           init_bn(planes * 4), cin_pad_to=c2),
    }


# ------------------------------ forward --------------------------------------

def bottleneck_forward(x_nchw, params, key):
    """Bottleneck.forward with stride=1, downsample=None (module defaults)."""
    x = jnp.transpose(x_nchw, (0, 2, 3, 1))              # NCHW -> NHWC (boundary only)
    N, H, W, C = x.shape
    M = N * H * W

    k1, k2, k3 = jax.random.split(key, 3)
    s1, s2, s3 = (jax.random.randint(k, (1,), 0, 2 ** 31 - 1, dtype=jnp.int32)
                  for k in (k1, k2, k3))

    x2d = x.reshape(M, C).astype(jnp.bfloat16)           # conv1 input AND residual

    p1, p2, p3 = params["conv1"], params["conv2"], params["conv3"]

    # conv1 + bn1 + relu (1x1); padded channels stay zero and flow to conv2.
    out = flipout_conv1x1_bn_relu_call(s1, x2d, p1["wmu"], p1["wdl"], p1["bias"])
    out = out.reshape(N, H, W, p1["cop"])

    # conv2 + bn2 + relu (3x3, stride 1, pad 1).
    out = flipout_conv3x3_bn_relu_call(s2, out, p2["wmu"], p2["wdl"], p2["bias"])

    # conv3 + bn3 + residual add + relu (residual only needs channel padding in toy shapes;
    # in real ResNet inplanes == planes*4 == Cop3 and this is a no-op).
    cop3 = p3["cop"]
    res2d = x2d if C == cop3 else jnp.pad(x2d, ((0, 0), (0, cop3 - C)))
    out = flipout_conv1x1_bn_relu_call(s3, out.reshape(M, p2["cop"]),
                                       p3["wmu"], p3["wdl"], p3["bias"],
                                       residual2d=res2d)

    cout = p3["cout"]
    out = out[:, :cout].reshape(N, H, W, cout)            # single slice at module boundary
    return jnp.transpose(out, (0, 3, 1, 2)).astype(jnp.float32)   # NHWC -> NCHW


# ------------------------------- main ----------------------------------------

if __name__ == "__main__":
    key = jax.random.PRNGKey(0)
    k_param, k_x, k_fwd = jax.random.split(key, 3)

    inplanes, planes = 16, 4          # inplanes == planes*4 so the identity residual is valid
    N, H, W = 2, 8, 8

    params = init_bottleneck(k_param, inplanes, planes)
    x = jax.random.normal(k_x, (N, inplanes, H, W), jnp.float32)

    out = jax.block_until_ready(bottleneck_forward(x, params, k_fwd))

    assert out.shape == (N, planes * 4, H, W), out.shape
    assert bool(jnp.all(jnp.isfinite(out)))
    assert bool(jnp.all(out >= 0.0))  # final ReLU
    print("KERNEL_OK")
</pallas_src>

<mosaic_0001>
module attributes {stable_mosaic.version = 11 : i64} {
  func.func @_flipout_1x1_kernel(%arg0: i32, %arg1: memref<1xi32, #tpu.memory_space<smem>>, %arg2: memref<64x16xbf16, #tpu.memory_space<vmem>>, %arg3: memref<16x128xbf16, #tpu.memory_space<vmem>>, %arg4: memref<16x128xbf16, #tpu.memory_space<vmem>>, %arg5: memref<1x128xf32, #tpu.memory_space<vmem>>, %arg6: memref<64x128xbf16, #tpu.memory_space<vmem>>) attributes {dimension_semantics = [#tpu.dimension_semantics<parallel>], iteration_bounds = array<i64: 2>, scalar_prefetch = 1 : i64, scratch_operands = 0 : i64, tpu.core_type = #tpu.core_type<tc>, window_params = [{transform_indices = @transform_0, window_bounds = array<i64: 64, 16>}, {pipeline_mode = #tpu.pipeline_mode<synchronous>, transform_indices = @transform_1, window_bounds = array<i64: 16, 128>}, {pipeline_mode = #tpu.pipeline_mode<synchronous>, transform_indices = @transform_2, window_bounds = array<i64: 16, 128>}, {pipeline_mode = #tpu.pipeline_mode<synchronous>, transform_indices = @transform_3, window_bounds = array<i64: 1, 128>}, {transform_indices = @transform_4, window_bounds = array<i64: 64, 128>}]} {
    %c0 = arith.constant 0 : index
    %c0_0 = arith.constant 0 : index
    %0 = vector.load %arg2[%c0, %c0_0] : memref<64x16xbf16, #tpu.memory_space<vmem>>, vector<64x16xbf16>
    %c0_1 = arith.constant 0 : index
    %1 = memref.load %arg1[%c0_1] : memref<1xi32, #tpu.memory_space<smem>>
    %c64_i32 = arith.constant 64 : i32
    %2 = arith.muli %arg0, %c64_i32 : i32
    %c16_i32 = arith.constant 16 : i32
    %3 = arith.muli %2, %c16_i32 : i32
    %4 = tpu.iota {dimensions = array<i32: 0>} : vector<64x16xi32>
    %5 = tpu.iota {dimensions = array<i32: 1>} : vector<64x16xi32>
    %c16_i32_2 = arith.constant 16 : i32
    %6 = vector.broadcast %c16_i32_2 : i32 to vector<64x16xi32>
    %7 = arith.muli %4, %6 : vector<64x16xi32>
    %8 = vector.broadcast %3 : i32 to vector<64x16xi32>
    %9 = arith.addi %8, %7 : vector<64x16xi32>
    %10 = arith.addi %9, %5 : vector<64x16xi32>
    %11 = vector.broadcast %1 : i32 to vector<64x16xi32>
    %12 = arith.xori %10, %11 : vector<64x16xi32>
    %c16_i32_3 = arith.constant 16 : i32
    %13 = vector.broadcast %c16_i32_3 : i32 to vector<64x16xi32>
    %14 = arith.shrui %12, %13 : vector<64x16xi32>
    %15 = arith.xori %12, %14 : vector<64x16xi32>
    %c2146121005_i32 = arith.constant 2146121005 : i32
    %16 = vector.broadcast %c2146121005_i32 : i32 to vector<64x16xi32>
    %17 = arith.muli %15, %16 : vector<64x16xi32>
    %c15_i32 = arith.constant 15 : i32
    %18 = vector.broadcast %c15_i32 : i32 to vector<64x16xi32>
    %19 = arith.shrui %17, %18 : vector<64x16xi32>
    %20 = arith.xori %17, %19 : vector<64x16xi32>
    %c-2073254261_i32 = arith.constant -2073254261 : i32
    %21 = vector.broadcast %c-2073254261_i32 : i32 to vector<64x16xi32>
    %22 = arith.muli %20, %21 : vector<64x16xi32>
    %c16_i32_4 = arith.constant 16 : i32
    %23 = vector.broadcast %c16_i32_4 : i32 to vector<64x16xi32>
    %24 = arith.shrui %22, %23 : vector<64x16xi32>
    %25 = arith.xori %22, %24 : vector<64x16xi32>
    %c-2147483648_i32 = arith.constant -2147483648 : i32
    %26 = vector.broadcast %c-2147483648_i32 : i32 to vector<64x16xi32>
    %27 = arith.andi %25, %26 : vector<64x16xi32>
    %c0_i32 = arith.constant 0 : i32
    %28 = vector.broadcast %c0_i32 : i32 to vector<64x16xi32>
    %29 = arith.cmpi ne, %27, %28 : vector<64x16xi32>
    %cst = arith.constant -1.000000e+00 : f32
    %cst_5 = arith.constant 1.000000e+00 : f32
    %30 = vector.broadcast %cst : f32 to vector<64x16xf32>
    %31 = vector.broadcast %cst_5 : f32 to vector<64x16xf32>
    %32 = arith.select %29, %30, %31 : vector<64x16xi1>, vector<64x16xf32>
    %33 = arith.truncf %32 : vector<64x16xf32> to vector<64x16xbf16>
    %c0_6 = arith.constant 0 : index
    %c0_7 = arith.constant 0 : index
    %34 = vector.load %arg3[%c0_6, %c0_7] : memref<16x128xbf16, #tpu.memory_space<vmem>>, vector<16x128xbf16>
    %cst_8 = arith.constant dense<0.000000e+00> : vector<64x128xf32>
    %35 = tpu.matmul %0, %34, %cst_8 {dimension_numbers = #tpu.dot_dimension_numbers<[1], [0], [0], [1], [0, 0, 1, 1], [], []>} : vector<64x16xbf16>, vector<16x128xbf16>, vector<64x128xf32> -> vector<64x128xf32>
    %36 = arith.mulf %0, %33 : vector<64x16xbf16>
    %c0_9 = arith.constant 0 : index
    %c0_10 = arith.constant 0 : index
    %37 = vector.load %arg4[%c0_9, %c0_10] : memref<16x128xbf16, #tpu.memory_space<vmem>>, vector<16x128xbf16>
    %cst_11 = arith.constant dense<0.000000e+00> : vector<64x128xf32>
    %38 = tpu.matmul %36, %37, %cst_11 {dimension_numbers = #tpu.dot_dimension_numbers<[1], [0], [0], [1], [0, 0, 1, 1], [], []>} : vector<64x16xbf16>, vector<16x128xbf16>, vector<64x128xf32> -> vector<64x128xf32>
    %c128_i32 = arith.constant 128 : i32
    %39 = arith.muli %2, %c128_i32 : i32
    %c97517569_i32 = arith.constant 97517569 : i32
    %40 = arith.xori %1, %c97517569_i32 : i32
    %41 = tpu.iota {dimensions = array<i32: 0>} : vector<64x128xi32>
    %42 = tpu.iota {dimensions = array<i32: 1>} : vector<64x128xi32>
    %c128_i32_12 = arith.constant 128 : i32
    %43 = vector.broadcast %c128_i32_12 : i32 to vector<64x128xi32>
    %44 = arith.muli %41, %43 : vector<64x128xi32>
    %45 = vector.broadcast %39 : i32 to vector<64x128xi32>
    %46 = arith.addi %45, %44 : vector<64x128xi32>
    %47 = arith.addi %46, %42 : vector<64x128xi32>
    %48 = vector.broadcast %40 : i32 to vector<64x128xi32>
    %49 = arith.xori %47, %48 : vector<64x128xi32>
    %c16_i32_13 = arith.constant 16 : i32
    %50 = vector.broadcast %c16_i32_13 : i32 to vector<64x128xi32>
    %51 = arith.shrui %49, %50 : vector<64x128xi32>
    %52 = arith.xori %49, %51 : vector<64x128xi32>
    %c2146121005_i32_14 = arith.constant 2146121005 : i32
    %53 = vector.broadcast %c2146121005_i32_14 : i32 to vector<64x128xi32>
    %54 = arith.muli %52, %53 : vector<64x128xi32>
    %c15_i32_15 = arith.constant 15 : i32
    %55 = vector.broadcast %c15_i32_15 : i32 to vector<64x128xi32>
    %56 = arith.shrui %54, %55 : vector<64x128xi32>
    %57 = arith.xori %54, %56 : vector<64x128xi32>
    %c-2073254261_i32_16 = arith.constant -2073254261 : i32
    %58 = vector.broadcast %c-2073254261_i32_16 : i32 to vector<64x128xi32>
    %59 = arith.muli %57, %58 : vector<64x128xi32>
    %c16_i32_17 = arith.constant 16 : i32
    %60 = vector.broadcast %c16_i32_17 : i32 to vector<64x128xi32>
    %61 = arith.shrui %59, %60 : vector<64x128xi32>
    %62 = arith.xori %59, %61 : vector<64x128xi32>
    %c-2147483648_i32_18 = arith.constant -2147483648 : i32
    %63 = vector.broadcast %c-2147483648_i32_18 : i32 to vector<64x128xi32>
    %64 = arith.andi %62, %63 : vector<64x128xi32>
    %65 = tpu.bitcast %38 : vector<64x128xf32> -> vector<64x128xi32>
    %66 = arith.xori %65, %64 : vector<64x128xi32>
    %67 = tpu.bitcast %66 : vector<64x128xi32> -> vector<64x128xf32>
    %68 = arith.addf %35, %67 : vector<64x128xf32>
    %c0_19 = arith.constant 0 : index
    %c0_20 = arith.constant 0 : index
    %69 = vector.load %arg5[%c0_19, %c0_20] : memref<1x128xf32, #tpu.memory_space<vmem>>, vector<1x128xf32>
    %70 = vector.broadcast %69 : vector<1x128xf32> to vector<64x128xf32>
    %71 = arith.addf %68, %70 : vector<64x128xf32>
    %cst_21 = arith.constant 0.000000e+00 : f32
    %72 = vector.broadcast %cst_21 : f32 to vector<64x128xf32>
    %73 = arith.maximumf %71, %72 : vector<64x128xf32>
    %74 = arith.truncf %73 : vector<64x128xf32> to vector<64x128xbf16>
    %c0_22 = arith.constant 0 : index
    %c0_23 = arith.constant 0 : index
    %75 = vector.load %arg6[%c0_22, %c0_23] : memref<64x128xbf16, #tpu.memory_space<vmem>>, vector<64x128xbf16>
    tpu.vector_store %arg6[%c0_22, %c0_23], %74 {strides = array<i32>} : memref<64x128xbf16, #tpu.memory_space<vmem>>, vector<64x128xbf16>,
    return
  }
  func.func @transform_0(%arg0: i32, %arg1: memref<1xi32, #tpu.memory_space<smem>>) -> (i32, i32) {
    %c0_i32 = arith.constant 0 : i32
    %c0_i32_0 = arith.constant 0 : i32
    return %arg0, %c0_i32 : i32, i32
  }
  func.func @transform_1(%arg0: i32, %arg1: memref<1xi32, #tpu.memory_space<smem>>) -> (i32, i32) {
    %c0_i32 = arith.constant 0 : i32
    %c0_i32_0 = arith.constant 0 : i32
    %c0_i32_1 = arith.constant 0 : i32
    return %c0_i32, %c0_i32_0 : i32, i32
  }
  func.func @transform_2(%arg0: i32, %arg1: memref<1xi32, #tpu.memory_space<smem>>) -> (i32, i32) {
    %c0_i32 = arith.constant 0 : i32
    %c0_i32_0 = arith.constant 0 : i32
    %c0_i32_1 = arith.constant 0 : i32
    return %c0_i32, %c0_i32_0 : i32, i32
  }
  func.func @transform_3(%arg0: i32, %arg1: memref<1xi32, #tpu.memory_space<smem>>) -> (i32, i32) {
    %c0_i32 = arith.constant 0 : i32
    %c0_i32_0 = arith.constant 0 : i32
    %c0_i32_1 = arith.constant 0 : i32
    return %c0_i32, %c0_i32_0 : i32, i32
  }
  func.func @transform_4(%arg0: i32, %arg1: memref<1xi32, #tpu.memory_space<smem>>) -> (i32, i32) {
    %c0_i32 = arith.constant 0 : i32
    %c0_i32_0 = arith.constant 0 : i32
    return %arg0, %c0_i32 : i32, i32
  }
}

</mosaic_0001>

<llo_original>
// kernel: tpu_custom_call.1
$region0: #{tpu_custom_call.1}
  #allocation0 [shape = 'u32[]', space=smem, size = 0x4, offset = 0x4, fixed_abs, tag = 'smem constant byte address 0x4 - core index']
  #allocation1 [shape = 'u32[72,128]{1,0:T(1,128)}', space=vmem, size = 0x9000, scoped, tag = 'internal scratch']
  #allocation2 [shape = 's32[1]{0}', space=sflag, size = 0x4, scoped, tag = 'scoped memory for tpu_custom_call.1']
  #allocation3 [shape = 's32[1]{0:T(128)S(6)}', space=smem, size = 0x200, scoped, tag = 'prefetched SMEM operand 0']
  %s0 = inlined_call_operand.<no memory space> [shape: s32[1], index: 0, kind: input, shape index: {}]
  %s1 = inlined_call_operand.vmem [shape: bf16[128,16], index: 1, kind: input, shape index: {}]
  %s2 = inlined_call_operand.vmem [shape: bf16[16,128], index: 2, kind: input, shape index: {}]
  %s3 = inlined_call_operand.vmem [shape: bf16[16,128], index: 3, kind: input, shape index: {}]
  %s4 = inlined_call_operand.vmem [shape: f32[1,128], index: 4, kind: input, shape index: {}]
  %s5 = inlined_call_operand.hbm [shape: bf16[128,128], index: 5, kind: output, shape index: {}]
  %s6 = sld [smem:[#allocation0]]
  $region49: #{tpu_custom_call.1} parent=0
    _
  %s8 = ssub.s32 1, %s6
  %s9 = scalar_select 0, %s8, %s6
  %10 = sst [smem:[#allocation3]] %s0
  $region1: #{tpu_custom_call.1} parent=0
    #allocation4 [shape = 'u8[32768]{0}', space=vmem, size = 0x8000, scoped, tag = 'output window, operand 0']
    #allocation5 [shape = 's32[2]{0}', space=sflag, size = 0x8, scoped, tag = 'scoped memory for tpu_custom_call.1']
    %11 = vsyncpa [#allocation5], 0
    %s12 = scalar_lea.sflag [#allocation5], 1
    %13 = vsyncpa %s12, 0
    loop: start=0, step=1, limit=4
    $region2: #{tpu_custom_call.1} parent=1 // loop_pre_header
      _
    $region3: #{tpu_custom_call.1} parent=1 // loop_header
      %s15 = sphi 0, %s19
      %p16 = scmp.ge.s32.totalorder %s15, 4
      %s25 = sphi 0, %s27
      %s28 = sphi 0, %s25
      %s29 = sphi 0, %s28
      %s45 = sphi 0, %s29
      %s49 = sphi 0, %s49
      %s51 = sphi 0, %s49
      %s52 = sphi 0, %s51
      %s66 = sphi 0, %s52
      %s70 = sphi 0, %s70
      %s72 = sphi 0, %s70
      %s73 = sphi 0, %s72
      %s87 = sphi 0, %s73
      %s91 = sphi 0, %s91
      %s93 = sphi 0, %s91
      %s94 = sphi 0, %s93
      %s108 = sphi 0, %s94
      %s114 = sphi 0, %s116
      %s117 = sphi 0, %s114
      %s118 = sphi 0, %s117
      %s134 = sphi 0, %s118
    $region4: #{tpu_custom_call.1} parent=1 // loop_header_branch
      %18 = sbr.rel (%p16) target = $region8
    $region5: #{tpu_custom_call.1} parent=1 // loop_body
      %s20 = ssub.s32 %s15, 1
      %s21 = ssub.s32 %s15, 2
      %s22 = sadd.s32 %s15, 1
      %s23 = ssub.s32 %s15, %s22
      %p24 = scmp.eq.s32.totalorder %s23, 0
      %s26 = sadd.s32 %s25, 1
      %s27 = scalar_select %p24, %s25, %s26
      %p30 = pneg %p24
      %p31 = scmp.eq.s32.totalorder %s15, 1
      %p32 = por %p30, %p31
      %p33 = scmp.ne.s32.totalorder %s25, %s28
      %p34 = scmp.eq.s32.totalorder %s15, 0
      %p35 = por %p33, %p34
      %p36 = scmp.ne.s32.totalorder %s25, %s28
      %p37 = scmp.eq.s32.totalorder %s20, 1
      %p38 = por %p36, %p37
      %p39 = scmp.ne.s32.totalorder %s28, %s29
      %p40 = scmp.eq.s32.totalorder %s20, 0
      %p41 = por %p39, %p40
      %p42 = scmp.ne.s32.totalorder %s28, %s29
      %p43 = scmp.eq.s32.totalorder %s21, 1
      %p44 = por %p42, %p43
      %p46 = scmp.ne.s32.totalorder %s29, %s45
      %p47 = scmp.eq.s32.totalorder %s21, 0
      %p48 = por %p46, %p47
      %s50 = sadd.s32 %s49, 1
      %p53 = scmp.eq.s32.totalorder %s15, 1
      %p54 = scmp.ne.s32.totalorder %s49, %s51
      %p55 = scmp.eq.s32.totalorder %s15, 0
      %p56 = por %p54, %p55
      %p57 = scmp.ne.s32.totalorder %s49, %s51
      %p58 = scmp.eq.s32.totalorder %s20, 1
      %p59 = por %p57, %p58
      %p60 = scmp.ne.s32.totalorder %s51, %s52
      %p61 = scmp.eq.s32.totalorder %s20, 0
      %p62 = por %p60, %p61
      %p63 = scmp.ne.s32.totalorder %s51, %s52
      %p64 = scmp.eq.s32.totalorder %s21, 1
      %p65 = por %p63, %p64
      %p67 = scmp.ne.s32.totalorder %s52, %s66
      %p68 = scmp.eq.s32.totalorder %s21, 0
      %p69 = por %p67, %p68
      %s71 = sadd.s32 %s70, 1
      %p74 = scmp.eq.s32.totalorder %s15, 1
      %p75 = scmp.ne.s32.totalorder %s70, %s72
      %p76 = scmp.eq.s32.totalorder %s15, 0
      %p77 = por %p75, %p76
      %p78 = scmp.ne.s32.totalorder %s70, %s72
      %p79 = scmp.eq.s32.totalorder %s20, 1
      %p80 = por %p78, %p79
      %p81 = scmp.ne.s32.totalorder %s72, %s73
      %p82 = scmp.eq.s32.totalorder %s20, 0
      %p83 = por %p81, %p82
      %p84 = scmp.ne.s32.totalorder %s72, %s73
      %p85 = scmp.eq.s32.totalorder %s21, 1
      %p86 = por %p84, %p85
      %p88 = scmp.ne.s32.totalorder %s73, %s87
      %p89 = scmp.eq.s32.totalorder %s21, 0
      %p90 = por %p88, %p89
      %s92 = sadd.s32 %s91, 1
      %p95 = scmp.eq.s32.totalorder %s15, 1
      %p96 = scmp.ne.s32.totalorder %s91, %s93
      %p97 = scmp.eq.s32.totalorder %s15, 0
      %p98 = por %p96, %p97
      %p99 = scmp.ne.s32.totalorder %s91, %s93
      %p100 = scmp.eq.s32.totalorder %s20, 1
      %p101 = por %p99, %p100
      %p102 = scmp.ne.s32.totalorder %s93, %s94
      %p103 = scmp.eq.s32.totalorder %s20, 0
      %p104 = por %p102, %p103
      %p105 = scmp.ne.s32.totalorder %s93, %s94
      %p106 = scmp.eq.s32.totalorder %s21, 1
      %p107 = por %p105, %p106
      %p109 = scmp.ne.s32.totalorder %s94, %s108
      %p110 = scmp.eq.s32.totalorder %s21, 0
      %p111 = por %p109, %p110
      %s112 = ssub.s32 %s15, %s22
      %p113 = scmp.eq.s32.totalorder %s112, 0
      %s115 = sadd.s32 %s114, 1
      %s116 = scalar_select %p113, %s114, %s115
      %p119 = pneg %p113
      %p120 = scmp.eq.s32.totalorder %s15, 1
      %p121 = por %p119, %p120
      %p122 = scmp.ne.s32.totalorder %s114, %s117
      %p123 = scmp.eq.s32.totalorder %s15, 0
      %p124 = por %p122, %p123
      %p125 = scmp.ne.s32.totalorder %s114, %s117
      %p126 = scmp.eq.s32.totalorder %s20, 1
      %p127 = por %p125, %p126
      %p128 = scmp.ne.s32.totalorder %s117, %s118
      %p129 = scmp.eq.s32.totalorder %s20, 0
      %p130 = por %p128, %p129
      %p131 = scmp.ne.s32.totalorder %s117, %s118
      %p132 = scmp.eq.s32.totalorder %s21, 1
      %p133 = por %p131, %p132
      %p135 = scmp.ne.s32.totalorder %s118, %s134
      %p136 = scmp.eq.s32.totalorder %s21, 0
      %p137 = por %p135, %p136
      %p138 = scmp.le.s32.totalorder 1, %s15
      %p139 = scmp.lt.s32.totalorder %s15, 3
      %p140 = pnand %p138, %p139
      %p141 = pneg %p140
      // Predicated region
      $region9: #{tpu_custom_call.1} parent=5 // pred_check
        _
      $region10: #{tpu_custom_call.1} parent=5 // pred_check_branch
        %143 = sbr.rel (%p140) target = $region12
      $region11: #{tpu_custom_call.1} parent=5 // pred_region
        %s144 = ssub.s32 %s15, 1
        // Predicated region
        $region13: #{tpu_custom_call.1} parent=11 // pred_check
          %p145 = pneg %p62
        $region14: #{tpu_custom_call.1} parent=11 // pred_check_branch
          %147 = sbr.rel (%p145) target = $region16
        $region15: #{tpu_custom_call.1} parent=11 // pred_region
          _
        $region16: #{tpu_custom_call.1} parent=11 // pred_fallthru
          _
        // Predicated region
        $region17: #{tpu_custom_call.1} parent=11 // pred_check
          %p148 = pneg %p83
        $region18: #{tpu_custom_call.1} parent=11 // pred_check_branch
          %150 = sbr.rel (%p148) target = $region20
        $region19: #{tpu_custom_call.1} parent=11 // pred_region
          _
        $region20: #{tpu_custom_call.1} parent=11 // pred_fallthru
          _
        // Predicated region
        $region21: #{tpu_custom_call.1} parent=11 // pred_check
          %p151 = pneg %p104
        $region22: #{tpu_custom_call.1} parent=11 // pred_check_branch
          %153 = sbr.rel (%p151) target = $region24
        $region23: #{tpu_custom_call.1} parent=11 // pred_region
          _
        $region24: #{tpu_custom_call.1} parent=11 // pred_fallthru
          _
      $region12: #{tpu_custom_call.1} parent=5 // pred_fallthru
        _
      %p154 = scmp.lt.s32.totalorder %s15, 2
      // Predicated region
      $region25: #{tpu_custom_call.1} parent=5 // pred_check
        %p155 = pneg %p154
      $region26: #{tpu_custom_call.1} parent=5 // pred_check_branch
        %157 = sbr.rel (%p155) target = $region28
      $region27: #{tpu_custom_call.1} parent=5 // pred_region
        // Predicated region
        $region29: #{tpu_custom_call.1} parent=27 // pred_check
          %p158 = pneg %p35
        $region30: #{tpu_custom_call.1} parent=27 // pred_check_branch
          %160 = sbr.rel (%p158) target = $region32
        $region31: #{tpu_custom_call.1} parent=27 // pred_region
          %s161 = smul.u32 8, %s15
          %p162 = scmp.lt.s32.totalorder %s161, 15
          %s163 = scalar_select %p162, %s161, 15
          %s164 = smul.addr %s163, 4
          %s165 = scalar_lea.vmem %s1, %s164
          %s166 = smul.u32 8, %s15
        $region32: #{tpu_custom_call.1} parent=27 // pred_fallthru
          _
      $region28: #{tpu_custom_call.1} parent=5 // pred_fallthru
        _
      %p167 = scmp.le.s32.totalorder 1, %s15
      %p168 = scmp.lt.s32.totalorder %s15, 3
      %p169 = pnand %p167, %p168
      %p170 = pneg %p169
      // Predicated region
      $region33: #{tpu_custom_call.1} parent=5 // pred_check
        _
      $region34: #{tpu_custom_call.1} parent=5 // pred_check_branch
        %172 = sbr.rel (%p169) target = $region36
      $region35: #{tpu_custom_call.1} parent=5 // pred_region
        %s173 = ssub.s32 %s15, 1
        %s174 = smul.u32 8, %s20
        %p175 = scmp.lt.s32.totalorder %s174, 15
        %s176 = scalar_select %p175, %s174, 15
        %s177 = smul.addr %s176, 4
        %s178 = scalar_lea.vmem %s1, %s177
        %p179 = pneg %p41
        %p180 = pneg %p38
        %p181 = pneg %p62
        %p182 = pneg %p59
        %p183 = pneg %p83
        %p184 = pneg %p80
        %p185 = pneg %p104
        %p186 = pneg %p101
        %p187 = pneg %p130
        %p188 = pneg %p127
        %s189 = sand.u32 %s117, 1
        %s190 = scalar_lea.sflag [#allocation5], %s189
        %s191 = sand.u32 %s117, 1
        %s192 = smul.addr %s191, 32
        %s193 = scalar_lea.vmem [#allocation4], %s192
        %s194 = smul.u32 8, %s20
        %p195 = scmp.lt.s32.totalorder %s194, 15
        %s196 = scalar_select %p195, %s194, 15
        %s197 = smul.addr %s196, 4
        %s198 = scalar_lea.vmem %s1, %s197
        %s199 = smul.u32 8, %s20
        %s200 = smul.u32 8, %s20
        %v202 = vld [vmem:[%s198] sm:$0xf]
        %v203 = vld [vmem:[%s198 + $0x4] sm:$0xf]
        %v204 = vld [vmem:[%s198 + $0x8] sm:$0xf]
        %v205 = vld [vmem:[%s198 + $0xc] sm:$0xf]
        %v206 = vld [vmem:[%s198 + $0x10] sm:$0xf]
        %v207 = vld [vmem:[%s198 + $0x14] sm:$0xf]
        %v208 = vld [vmem:[%s198 + $0x18] sm:$0xf]
        %v209 = vld [vmem:[%s198 + $0x1c] sm:$0xf]
        %s210 = sld [smem:[#allocation3]]
        %s211 = smul.u32 %s20, 1024
        %v212 = vlaneseq
        %v213 = vshrl.u32 %v212, 7
        %v214 = vadd.s32 %v213, 8
        %v215 = vadd.s32 %v213, 16
        %v216 = vadd.s32 %v213, 24
        %v217 = vadd.s32 %v213, 32
        %v218 = vadd.s32 %v213, 40
        %v219 = vadd.s32 %v213, 48
        %v220 = vadd.s32 %v213, 56
        %v221 = vlaneseq
        %v222 = vand.u32 %v221, 127
        %v223 = vmul.u32 %v213, 16
        %v224 = vmul.u32 %v214, 16
        %v225 = vmul.u32 %v215, 16
        %v226 = vmul.u32 %v216, 16
        %v227 = vmul.u32 %v217, 16
        %v228 = vmul.u32 %v218, 16
        %v229 = vmul.u32 %v219, 16
        %v230 = vmul.u32 %v220, 16
        %v231 = vstv %s211
        %v232 = vadd.s32 %v231, %v223
        %v233 = vadd.s32 %v231, %v224
        %v234 = vadd.s32 %v231, %v225
        %v235 = vadd.s32 %v231, %v226
        %v236 = vadd.s32 %v231, %v227
        %v237 = vadd.s32 %v231, %v228
        %v238 = vadd.s32 %v231, %v229
        %v239 = vadd.s32 %v231, %v230
        %v240 = vadd.s32 %v232, %v222
        %v241 = vadd.s32 %v233, %v222
        %v242 = vadd.s32 %v234, %v222
        %v243 = vadd.s32 %v235, %v222
        %v244 = vadd.s32 %v236, %v222
        %v245 = vadd.s32 %v237, %v222
        %v246 = vadd.s32 %v238, %v222
        %v247 = vadd.s32 %v239, %v222
        %v248 = vstv %s210
        %v249 = vxor.u32 %v240, %v248
        %v250 = vxor.u32 %v241, %v248
        %v251 = vxor.u32 %v242, %v248
        %v252 = vxor.u32 %v243, %v248
        %v253 = vxor.u32 %v244, %v248
        %v254 = vxor.u32 %v245, %v248
        %v255 = vxor.u32 %v246, %v248
        %v256 = vxor.u32 %v247, %v248
        %v257 = vshrl.u32 %v249, 16
        %v258 = vshrl.u32 %v250, 16
        %v259 = vshrl.u32 %v251, 16
        %v260 = vshrl.u32 %v252, 16
        %v261 = vshrl.u32 %v253, 16
        %v262 = vshrl.u32 %v254, 16
        %v263 = vshrl.u32 %v255, 16
        %v264 = vshrl.u32 %v256, 16
        %v265 = vxor.u32 %v249, %v257
        %v266 = vxor.u32 %v250, %v258
        %v267 = vxor.u32 %v251, %v259
        %v268 = vxor.u32 %v252, %v260
        %v269 = vxor.u32 %v253, %v261
        %v270 = vxor.u32 %v254, %v262
        %v271 = vxor.u32 %v255, %v263
        %v272 = vxor.u32 %v256, %v264
        %v273 = vmul.u32 %v265, 2146121005
        %v274 = vmul.u32 %v266, 2146121005
        %v275 = vmul.u32 %v267, 2146121005
        %v276 = vmul.u32 %v268, 2146121005
        %v277 = vmul.u32 %v269, 2146121005
        %v278 = vmul.u32 %v270, 2146121005
        %v279 = vmul.u32 %v271, 2146121005
        %v280 = vmul.u32 %v272, 2146121005
        %v281 = vshrl.u32 %v273, 15
        %v282 = vshrl.u32 %v274, 15
        %v283 = vshrl.u32 %v275, 15
        %v284 = vshrl.u32 %v276, 15
        %v285 = vshrl.u32 %v277, 15
        %v286 = vshrl.u32 %v278, 15
        %v287 = vshrl.u32 %v279, 15
        %v288 = vshrl.u32 %v280, 15
        %v289 = vxor.u32 %v273, %v281
        %v290 = vxor.u32 %v274, %v282
        %v291 = vxor.u32 %v275, %v283
        %v292 = vxor.u32 %v276, %v284
        %v293 = vxor.u32 %v277, %v285
        %v294 = vxor.u32 %v278, %v286
        %v295 = vxor.u32 %v279, %v287
        %v296 = vxor.u32 %v280, %v288
        %v297 = vmul.u32 %v289, 2221713035
        %v298 = vmul.u32 %v290, 2221713035
        %v299 = vmul.u32 %v291, 2221713035
        %v300 = vmul.u32 %v292, 2221713035
        %v301 = vmul.u32 %v293, 2221713035
        %v302 = vmul.u32 %v294, 2221713035
        %v303 = vmul.u32 %v295, 2221713035
        %v304 = vmul.u32 %v296, 2221713035
        %v305 = vshrl.u32 %v297, 16
        %v306 = vshrl.u32 %v298, 16
        %v307 = vshrl.u32 %v299, 16
        %v308 = vshrl.u32 %v300, 16
        %v309 = vshrl.u32 %v301, 16
        %v310 = vshrl.u32 %v302, 16
        %v311 = vshrl.u32 %v303, 16
        %v312 = vshrl.u32 %v304, 16
        %v313 = vxor.u32 %v297, %v305
        %v314 = vxor.u32 %v298, %v306
        %v315 = vxor.u32 %v299, %v307
        %v316 = vxor.u32 %v300, %v308
        %v317 = vxor.u32 %v301, %v309
        %v318 = vxor.u32 %v302, %v310
        %v319 = vxor.u32 %v303, %v311
        %v320 = vxor.u32 %v304, %v312
        %v321 = vand.u32 %v313, 2147483648
        %v322 = vand.u32 %v314, 2147483648
        %v323 = vand.u32 %v315, 2147483648
        %v324 = vand.u32 %v316, 2147483648
        %v325 = vand.u32 %v317, 2147483648
        %v326 = vand.u32 %v318, 2147483648
        %v327 = vand.u32 %v319, 2147483648
        %v328 = vand.u32 %v320, 2147483648
        %vm329 = vcmp.ne.s32.totalorder %v321, 0
        %vm330 = vcmp.ne.s32.totalorder %v322, 0
        %vm331 = vcmp.ne.s32.totalorder %v323, 0
        %vm332 = vcmp.ne.s32.totalorder %v324, 0
        %vm333 = vcmp.ne.s32.totalorder %v325, 0
        %vm334 = vcmp.ne.s32.totalorder %v326, 0
        %vm335 = vcmp.ne.s32.totalorder %v327, 0
        %vm336 = vcmp.ne.s32.totalorder %v328, 0
        %v337 = vsel %vm329, -1.0, 1.0
        %v338 = vsel %vm330, -1.0, 1.0
        %v339 = vsel %vm331, -1.0, 1.0
        %v340 = vsel %vm332, -1.0, 1.0
        %v341 = vsel %vm333, -1.0, 1.0
        %v342 = vsel %vm334, -1.0, 1.0
        %v343 = vsel %vm335, -1.0, 1.0
        %v344 = vsel %vm336, -1.0, 1.0
        %v345 = vpack.c.bf16 %v337, %v337
        %v346 = vpack.c.bf16 %v338, %v338
        %v347 = vpack.c.bf16 %v339, %v339
        %v348 = vpack.c.bf16 %v340, %v340
        %v349 = vpack.c.bf16 %v341, %v341
        %v350 = vpack.c.bf16 %v342, %v342
        %v351 = vpack.c.bf16 %v343, %v343
        %v352 = vpack.c.bf16 %v344, %v344
        %v353 = vld [vmem:[%s2] sm:$0xf]
        %v354 = vld [vmem:[%s2 + $0x4] sm:$0xf]
        %v355 = vunpack.c.l.bf16 %v202
        %v356 = vunpack.c.l.bf16 %v203
        %v357 = vunpack.c.l.bf16 %v204
        %v358 = vunpack.c.l.bf16 %v205
        %v359 = vunpack.c.l.bf16 %v206
        %v360 = vunpack.c.l.bf16 %v207
        %v361 = vunpack.c.l.bf16 %v208
        %v362 = vunpack.c.l.bf16 %v209
        %v363 = vunpack.c.l.bf16 %v345
        %v364 = vunpack.c.l.bf16 %v346
        %v365 = vunpack.c.l.bf16 %v347
        %v366 = vunpack.c.l.bf16 %v348
        %v367 = vunpack.c.l.bf16 %v349
        %v368 = vunpack.c.l.bf16 %v350
        %v369 = vunpack.c.l.bf16 %v351
        %v370 = vunpack.c.l.bf16 %v352
        %v371 = vmul.f32 %v355, %v363
        %v372 = vmul.f32 %v356, %v364
        %v373 = vmul.f32 %v357, %v365
        %v374 = vmul.f32 %v358, %v366
        %v375 = vmul.f32 %v359, %v367
        %v376 = vmul.f32 %v360, %v368
        %v377 = vmul.f32 %v361, %v369
        %v378 = vmul.f32 %v362, %v370
        %v379 = vpack.c.bf16 %v372, %v371
        %v380 = vpack.c.bf16 %v374, %v373
        %v381 = vpack.c.bf16 %v376, %v375
        %v382 = vpack.c.bf16 %v378, %v377
        %v383 = vld [vmem:[%s3] sm:$0xf]
        %v384 = vld [vmem:[%s3 + $0x4] sm:$0xf]
        %v387 = vunpack.c.l.b16 %v383
        %v388 = vunpack.c.l.b16 %v384
        %v389 = vpack.c.b16 %v388, %v387
        %vm391 = vcmask 130048
        %v393 = vsel %vm391, %v379, 0
        %v396 = vsel %vm391, %v380, 0
        %v399 = vsel %vm391, %v381, 0
        %v402 = vsel %vm391, %v382, 0
        %404 = vmatpush.bf16.msra.mxu0 0
        %405 = vmatpush.bf16.msra.mxu0 0
        %406 = vmatpush.bf16.msra.mxu0 0
        %407 = vmatpush.bf16.msra.mxu0 0
        %408 = vmatpush.bf16.msra.mxu0 0
        %409 = vmatpush.bf16.msra.mxu0 0
        %410 = vmatpush.bf16.msra.mxu0 0
        %411 = vmatpush.bf16.msra.mxu0 %v389
        %412 = vmatmul.bf16.gmra.mxu0 %v393
        %v413 = vpop.f32.mrf.mxu0
        %v414 = vadd.f32 0.0, %v413
        %v415 = vpop.f32.mrf.mxu0
        %v416 = vadd.f32 0.0, %v415
        %417 = vmatmul.bf16.gmra.mxu0 %v396
        %v418 = vpop.f32.mrf.mxu0
        %v419 = vadd.f32 0.0, %v418
        %v420 = vpop.f32.mrf.mxu0
        %v421 = vadd.f32 0.0, %v420
        %422 = vmatmul.bf16.gmra.mxu0 %v399
        %v423 = vpop.f32.mrf.mxu0
        %v424 = vadd.f32 0.0, %v423
        %v425 = vpop.f32.mrf.mxu0
        %v426 = vadd.f32 0.0, %v425
        %427 = vmatmul.bf16.gmra.mxu0 %v402
        %v428 = vpop.f32.mrf.mxu0
        %v429 = vadd.f32 0.0, %v428
        %v430 = vpop.f32.mrf.mxu0
        %v431 = vadd.f32 0.0, %v430
        %432 = vdwg.mxu0
        %s433 = smul.u32 %s20, 8192
        %s434 = sxor.u32 %s210, 97517569
        %v435 = vmul.u32 %v213, 128
        %v436 = vmul.u32 %v214, 128
        %v437 = vmul.u32 %v215, 128
        %v438 = vmul.u32 %v216, 128
        %v439 = vmul.u32 %v217, 128
        %v440 = vmul.u32 %v218, 128
        %v441 = vmul.u32 %v219, 128
        %v442 = vmul.u32 %v220, 128
        %v443 = vstv %s433
        %v444 = vadd.s32 %v443, %v435
        %v445 = vadd.s32 %v443, %v436
        %v446 = vadd.s32 %v443, %v437
        %v447 = vadd.s32 %v443, %v438
        %v448 = vadd.s32 %v443, %v439
        %v449 = vadd.s32 %v443, %v440
        %v450 = vadd.s32 %v443, %v441
        %v451 = vadd.s32 %v443, %v442
        %v452 = vadd.s32 %v444, %v222
        %v453 = vadd.s32 %v445, %v222
        %v454 = vadd.s32 %v446, %v222
        %v455 = vadd.s32 %v447, %v222
        %v456 = vadd.s32 %v448, %v222
        %v457 = vadd.s32 %v449, %v222
        %v458 = vadd.s32 %v450, %v222
        %v459 = vadd.s32 %v451, %v222
        %v460 = vstv %s434
        %v461 = vxor.u32 %v452, %v460
        %v462 = vxor.u32 %v453, %v460
        %v463 = vxor.u32 %v454, %v460
        %v464 = vxor.u32 %v455, %v460
        %v465 = vxor.u32 %v456, %v460
        %v466 = vxor.u32 %v457, %v460
        %v467 = vxor.u32 %v458, %v460
        %v468 = vxor.u32 %v459, %v460
        %v469 = vshrl.u32 %v461, 16
        %v470 = vshrl.u32 %v462, 16
        %v471 = vshrl.u32 %v463, 16
        %v472 = vshrl.u32 %v464, 16
        %v473 = vshrl.u32 %v465, 16
        %v474 = vshrl.u32 %v466, 16
        %v475 = vshrl.u32 %v467, 16
        %v476 = vshrl.u32 %v468, 16
        %v477 = vxor.u32 %v461, %v469
        %v478 = vxor.u32 %v462, %v470
        %v479 = vxor.u32 %v463, %v471
        %v480 = vxor.u32 %v464, %v472
        %v481 = vxor.u32 %v465, %v473
        %v482 = vxor.u32 %v466, %v474
        %v483 = vxor.u32 %v467, %v475
        %v484 = vxor.u32 %v468, %v476
        %v485 = vmul.u32 %v477, 2146121005
        %v486 = vmul.u32 %v478, 2146121005
        %v487 = vmul.u32 %v479, 2146121005
        %v488 = vmul.u32 %v480, 2146121005
        %v489 = vmul.u32 %v481, 2146121005
        %v490 = vmul.u32 %v482, 2146121005
        %v491 = vmul.u32 %v483, 2146121005
        %v492 = vmul.u32 %v484, 2146121005
        %v493 = vshrl.u32 %v485, 15
        %v494 = vshrl.u32 %v486, 15
        %v495 = vshrl.u32 %v487, 15
        %v496 = vshrl.u32 %v488, 15
        %v497 = vshrl.u32 %v489, 15
        %v498 = vshrl.u32 %v490, 15
        %v499 = vshrl.u32 %v491, 15
        %v500 = vshrl.u32 %v492, 15
        %v501 = vxor.u32 %v485, %v493
        %v502 = vxor.u32 %v486, %v494
        %v503 = vxor.u32 %v487, %v495
        %v504 = vxor.u32 %v488, %v496
        %v505 = vxor.u32 %v489, %v497
        %v506 = vxor.u32 %v490, %v498
        %v507 = vxor.u32 %v491, %v499
        %v508 = vxor.u32 %v492, %v500
        %v509 = vmul.u32 %v501, 2221713035
        %v510 = vmul.u32 %v502, 2221713035
        %v511 = vmul.u32 %v503, 2221713035
        %v512 = vmul.u32 %v504, 2221713035
        %v513 = vmul.u32 %v505, 2221713035
        %v514 = vmul.u32 %v506, 2221713035
        %v515 = vmul.u32 %v507, 2221713035
        %v516 = vmul.u32 %v508, 2221713035
        %v517 = vshrl.u32 %v509, 16
        %v518 = vshrl.u32 %v510, 16
        %v519 = vshrl.u32 %v511, 16
        %v520 = vshrl.u32 %v512, 16
        %v521 = vshrl.u32 %v513, 16
        %v522 = vshrl.u32 %v514, 16
        %v523 = vshrl.u32 %v515, 16
        %v524 = vshrl.u32 %v516, 16
        %v525 = vxor.u32 %v509, %v517
        %v526 = vxor.u32 %v510, %v518
        %v527 = vxor.u32 %v511, %v519
        %v528 = vxor.u32 %v512, %v520
        %v529 = vxor.u32 %v513, %v521
        %v530 = vxor.u32 %v514, %v522
        %v531 = vxor.u32 %v515, %v523
        %v532 = vxor.u32 %v516, %v524
        %v533 = vand.u32 %v525, 2147483648
        %v534 = vand.u32 %v526, 2147483648
        %v535 = vand.u32 %v527, 2147483648
        %v536 = vand.u32 %v528, 2147483648
        %v537 = vand.u32 %v529, 2147483648
        %v538 = vand.u32 %v530, 2147483648
        %v539 = vand.u32 %v531, 2147483648
        %v540 = vand.u32 %v532, 2147483648
        %v549 = vxor.u32 %v414, %v533
        %v550 = vxor.u32 %v416, %v534
        %v551 = vxor.u32 %v419, %v535
        %v552 = vxor.u32 %v421, %v536
        %v553 = vxor.u32 %v424, %v537
        %v554 = vxor.u32 %v426, %v538
        %v555 = vxor.u32 %v429, %v539
        %v556 = vxor.u32 %v431, %v540
        %v573 = vunpack.c.l.b16 %v202
        %v574 = vunpack.c.l.b16 %v203
        %v575 = vunpack.c.l.b16 %v204
        %v576 = vunpack.c.l.b16 %v205
        %v577 = vunpack.c.l.b16 %v206
        %v578 = vunpack.c.l.b16 %v207
        %v579 = vunpack.c.l.b16 %v208
        %v580 = vunpack.c.l.b16 %v209
        %v581 = vpack.c.b16 %v574, %v573
        %v582 = vpack.c.b16 %v576, %v575
        %v583 = vpack.c.b16 %v578, %v577
        %v584 = vpack.c.b16 %v580, %v579
        %v587 = vunpack.c.l.b16 %v353
        %v588 = vunpack.c.l.b16 %v354
        %v589 = vpack.c.b16 %v588, %v587
        %v592 = vsel %vm391, %v581, 0
        %v595 = vsel %vm391, %v582, 0
        %v598 = vsel %vm391, %v583, 0
        %v601 = vsel %vm391, %v584, 0
        %603 = vmatpush.bf16.msra.mxu0 0
        %604 = vmatpush.bf16.msra.mxu0 0
        %605 = vmatpush.bf16.msra.mxu0 0
        %606 = vmatpush.bf16.msra.mxu0 0
        %607 = vmatpush.bf16.msra.mxu0 0
        %608 = vmatpush.bf16.msra.mxu0 0
        %609 = vmatpush.bf16.msra.mxu0 0
        %610 = vmatpush.bf16.msra.mxu0 %v589
        %611 = vmatmul.bf16.gmra.mxu0 %v592
        %v612 = vpop.f32.mrf.mxu0
        %v613 = vadd.f32 %v549, %v612
        %v614 = vpop.f32.mrf.mxu0
        %v615 = vadd.f32 %v550, %v614
        %616 = vmatmul.bf16.gmra.mxu0 %v595
        %v617 = vpop.f32.mrf.mxu0
        %v618 = vadd.f32 %v551, %v617
        %v619 = vpop.f32.mrf.mxu0
        %v620 = vadd.f32 %v552, %v619
        %621 = vmatmul.bf16.gmra.mxu0 %v598
        %v622 = vpop.f32.mrf.mxu0
        %v623 = vadd.f32 %v553, %v622
        %v624 = vpop.f32.mrf.mxu0
        %v625 = vadd.f32 %v554, %v624
        %626 = vmatmul.bf16.gmra.mxu0 %v601
        %v627 = vpop.f32.mrf.mxu0
        %v628 = vadd.f32 %v555, %v627
        %v629 = vpop.f32.mrf.mxu0
        %v630 = vadd.f32 %v556, %v629
        %631 = vdwg.mxu0
        %v632 = vld [vmem:[%s4] sm:$0x1]
        %v634 = vperm.slane %v632, 0
        %v636 = vadd.f32 %v613, %v634
        %v637 = vadd.f32 %v615, %v634
        %v638 = vadd.f32 %v618, %v634
        %v639 = vadd.f32 %v620, %v634
        %v640 = vadd.f32 %v623, %v634
        %v641 = vadd.f32 %v625, %v634
        %v642 = vadd.f32 %v628, %v634
        %v643 = vadd.f32 %v630, %v634
        %v644 = vmax.f32 %v636, 0.0
        %v645 = vmax.f32 %v637, 0.0
        %v646 = vmax.f32 %v638, 0.0
        %v647 = vmax.f32 %v639, 0.0
        %v648 = vmax.f32 %v640, 0.0
        %v649 = vmax.f32 %v641, 0.0
        %v650 = vmax.f32 %v642, 0.0
        %v651 = vmax.f32 %v643, 0.0
        %v652 = vpack.c.bf16 %v644, %v644
        %v653 = vpack.c.bf16 %v645, %v645
        %v654 = vpack.c.bf16 %v646, %v646
        %v655 = vpack.c.bf16 %v647, %v647
        %v656 = vpack.c.bf16 %v648, %v648
        %v657 = vpack.c.bf16 %v649, %v649
        %v658 = vpack.c.bf16 %v650, %v650
        %v659 = vpack.c.bf16 %v651, %v651
        %660 = vst [vmem:[%s193] sm:$0xf] %v652
        %661 = vst [vmem:[%s193 + $0x4] sm:$0xf] %v653
        %662 = vst [vmem:[%s193 + $0x8] sm:$0xf] %v654
        %663 = vst [vmem:[%s193 + $0xc] sm:$0xf] %v655
        %664 = vst [vmem:[%s193 + $0x10] sm:$0xf] %v656
        %665 = vst [vmem:[%s193 + $0x14] sm:$0xf] %v657
        %666 = vst [vmem:[%s193 + $0x18] sm:$0xf] %v658
        %667 = vst [vmem:[%s193 + $0x1c] sm:$0xf] %v659
        %s668 = sand.u32 %s117, 1
        %s669 = scalar_lea.sflag [#allocation5], %s668
        %s670 = sand.u32 %s117, 1
        %s671 = smul.addr %s670, 32
        %s672 = scalar_lea.vmem [#allocation4], %s671
        // Predicated region
        $region37: #{tpu_custom_call.1} parent=35 // pred_check
          %p673 = pneg %p127
        $region38: #{tpu_custom_call.1} parent=35 // pred_check_branch
          %675 = sbr.rel (%p673) target = $region40
        $region39: #{tpu_custom_call.1} parent=35 // pred_region
          %s676 = smul.u32 8, %s20
          %678 = vsyncadd %s669, 0
          %s679 = smul.addr %s676, 4
          %s680 = scalar_lea.hbm %s5, %s679
          %s681 = sshll.u32 %s672, 4
          %s682 = int_to_ptr.vmem [resolvable:$true] %s681
          %s683 = sshll.u32 %s680, 4
          %s684 = int_to_ptr.hbm [resolvable:$true] %s683
          %689 = dma.vmem_to_hbm [thread:$0]  %s682, 512, %s684, %s669, 64, 64, 4
        $region40: #{tpu_custom_call.1} parent=35 // pred_fallthru
          _
      $region36: #{tpu_custom_call.1} parent=5 // pred_fallthru
        _
      %p690 = scmp.le.s32.totalorder 2, %s15
      // Predicated region
      $region41: #{tpu_custom_call.1} parent=5 // pred_check
        %p691 = pneg %p690
      $region42: #{tpu_custom_call.1} parent=5 // pred_check_branch
        %693 = sbr.rel (%p691) target = $region44
      $region43: #{tpu_custom_call.1} parent=5 // pred_region
        %s694 = ssub.s32 %s15, 2
        // Predicated region
        $region45: #{tpu_custom_call.1} parent=43 // pred_check
          %p695 = pneg %p133
        $region46: #{tpu_custom_call.1} parent=43 // pred_check_branch
          %697 = sbr.rel (%p695) target = $region48
        $region47: #{tpu_custom_call.1} parent=43 // pred_region
          %s698 = sand.u32 %s118, 1
          %s699 = scalar_lea.sflag [#allocation5], %s698
          %s700 = sand.u32 %s118, 1
          %s701 = smul.addr %s700, 32
          %s702 = scalar_lea.vmem [#allocation4], %s701
          %704 = dma.done %s699, 512
        $region48: #{tpu_custom_call.1} parent=43 // pred_fallthru
          _
      $region44: #{tpu_custom_call.1} parent=5 // pred_fallthru
        _
    $region6: #{tpu_custom_call.1} parent=1 // loop_footer
      %s19 = sadd.s32 1, %s15
    $region7: #{tpu_custom_call.1} parent=1 // loop_footer_branch
      %14 = sbr.rel target = $region3
    $region8: #{tpu_custom_call.1} parent=1 // loop_exit
      _
    %705 = vsyncpa [#allocation5], 1
    %s706 = scalar_lea.sflag [#allocation5], 1
    %707 = vsyncpa %s706, 1

</llo_original>
